<compile_context>
chip_gen: v7x
topology: tpu7x:2x2x1
jax: 0.10.0
libtpu: 0.0.40
codegen_flags: <defaults>
</compile_context>

<pallas_src>
import functools

import jax
import jax.numpy as jnp
from jax import lax
from jax.experimental import pallas as pl
from jax.experimental.pallas import tpu as pltpu

NEG_SLOPE = 0.01  # nn.LeakyReLU default
_LANE = 128


def _leaky_relu(x):
    return jnp.where(x > 0, x, NEG_SLOPE * x)


def _round_up(x, m):
    return (x + m - 1) // m * m


def mlp_kernel(obs_ref, act_ref, w1_ref, b1_ref, w2_ref, b2_ref, w3_ref, b3_ref,
               o_ref, x_scr):
    """One batch tile of the fused 3-layer MLP.

    obs_ref: (TB, Do) f32    act_ref: (TB, Da) f32
    w1_ref:  (Kp, H)  bf16 (rows [Do+Da:] are zero)   b1_ref: (1, H) f32
    w2_ref:  (H, H)   bf16                            b2_ref: (1, H) f32
    w3_ref:  (1, H)   f32                             b3_ref: (1, 1) f32 (SMEM)
    o_ref:   (1, TB)  f32   lane-dense output slab
    x_scr:   (TB, Kp) bf16  VMEM scratch holding [obs | act | 0] for one fused-K pass
    """
    tb, d_obs = obs_ref.shape
    d_act = act_ref.shape[1]
    k_pad = x_scr.shape[1]
    d_in = d_obs + d_act

    # Assemble the fused layer-1 operand in VMEM.  The f32 -> bf16 cast happens here
    # (hidden under DMA/MXU), not in the wrapper, so HBM sees the activations once.
    x_scr[:, :d_obs] = obs_ref[...].astype(jnp.bfloat16)
    x_scr[:, d_obs:d_in] = act_ref[...].astype(jnp.bfloat16)
    if k_pad > d_in:
        # Re-zero the K padding every step: scratch persists per-core, and although the
        # padded W1 rows are zero, stale-VMEM NaNs * 0 would still poison valid rows.
        x_scr[:, d_in:] = jnp.zeros((tb, k_pad - d_in), jnp.bfloat16)

    # Layer 1: single fused-K MXU pass, f32 accumulation; bias + LeakyReLU in f32 (VPU).
    h1 = jnp.dot(x_scr[...], w1_ref[...], preferred_element_type=jnp.float32)
    h1 = _leaky_relu(h1 + b1_ref[...])

    # Layer 2.
    h2 = jnp.dot(h1.astype(jnp.bfloat16), w2_ref[...],
                 preferred_element_type=jnp.float32)
    h2 = _leaky_relu(h2 + b2_ref[...])

    # Layer 3: N=1 output computed transposed -> (1, TB) so the store is lane-dense.
    # (Any h2 re-layout for this contraction rides the XLU / vector-extended slot and is
    #  a small fraction of the layer-1/2 MXU work, which is itself hidden under DMA.)
    y = lax.dot_general(w3_ref[...], h2, (((1,), (1,)), ((), ())),
                        preferred_element_type=jnp.float32)   # (1, TB)
    o_ref[...] = (y + b3_ref[0, 0]).astype(o_ref.dtype)


def _vmem_bytes_estimate(tb, d_obs, d_act, h, k_pad):
    """Conservative per-core VMEM footprint (double-buffered inputs, lane padding)."""
    obs_in = 2 * tb * _round_up(d_obs, _LANE) * 4      # f32 obs tiles (double-buffered)
    act_in = 2 * tb * _round_up(d_act, _LANE) * 4      # f32 act tiles (lane-padded)
    x_scr = tb * k_pad * 2                             # bf16 fused-K scratch
    temps = 3 * tb * _round_up(h, _LANE) * 4           # h1 / h2 / compiler temporaries
    out_buf = 2 * _round_up(tb, _LANE) * 4
    weights = 2 * ((k_pad + h) * h * 2 + (3 * h + 1) * 4)
    return obs_in + act_in + x_scr + temps + out_buf + weights


@functools.partial(jax.jit, static_argnames=("block_b",))
def fully_connected_mlp_forward(obs, act, params, block_b=8192):
    """obs: (B, *obs_shape), act: (B, *act_shape) -> (B, 1) float32."""
    b = obs.shape[0]
    flat_obs = obs.reshape(b, -1).astype(jnp.float32)   # no wrapper bf16 cast (review)
    flat_act = act.reshape(b, -1).astype(jnp.float32)
    d_obs = flat_obs.shape[1]
    d_act = flat_act.shape[1]
    d_in = d_obs + d_act
    k_pad = _round_up(d_in, _LANE)

    w1, b1, w2, b2, w3, b3 = params
    h = w1.shape[1]
    # Zero-padded fused W1 so layer 1 is a single K = k_pad contraction.
    w1_pad = jnp.zeros((k_pad, h), jnp.bfloat16).at[:d_in, :].set(
        w1.astype(jnp.bfloat16))
    w2b = w2.astype(jnp.bfloat16)
    w3r = w3.reshape(1, h).astype(jnp.float32)
    b1r = b1.reshape(1, h).astype(jnp.float32)
    b2r = b2.reshape(1, h).astype(jnp.float32)
    b3r = b3.reshape(1, 1).astype(jnp.float32)

    # ---- batch-tile selection (128-aligned, VMEM-budgeted, grid >= 2 when possible) --
    try:
        phys_vmem = int(pltpu.get_tpu_info().vmem_capacity_bytes)
    except Exception:
        phys_vmem = 64 * 1024 * 1024       # conservative fallback: v7x has 64 MiB / TC
    budget = int(0.6 * phys_vmem)

    tb = max(_LANE, _round_up(min(int(block_b), b), _LANE))
    if b >= 2 * _LANE:
        # Keep at least 2 grid steps so both v7x TensorCores get work ("parallel" axis).
        tb = min(tb, _round_up(-(-b // 2), _LANE))
    while tb > _LANE and _vmem_bytes_estimate(tb, d_obs, d_act, h, k_pad) > budget:
        tb = _round_up(tb // 2, _LANE)

    grid = (pl.cdiv(b, tb),)   # partial last block handled by masked stores (no jnp.pad)

    flops = 2 * b * (d_in * h + h * h + h)
    bytes_accessed = (b * (d_obs + d_act) * 4       # f32 activations in
                      + b * 4                       # f32 output slab
                      + (k_pad + h) * h * 2         # bf16 weights
                      + (3 * h + 1) * 4)            # f32 biases + w3 row

    vmem_limit = min(int(0.85 * phys_vmem),
                     max(32 * 1024 * 1024,
                         _vmem_bytes_estimate(tb, d_obs, d_act, h, k_pad) + (8 << 20)))

    out = pl.pallas_call(
        mlp_kernel,
        out_shape=jax.ShapeDtypeStruct((1, b), jnp.float32),
        grid_spec=pltpu.PrefetchScalarGridSpec(
            num_scalar_prefetch=0,
            grid=grid,
            in_specs=[
                pl.BlockSpec((tb, d_obs), lambda i: (i, 0)),        # obs tile (f32)
                pl.BlockSpec((tb, d_act), lambda i: (i, 0)),        # act tile (f32)
                pl.BlockSpec((k_pad, h), lambda i: (0, 0)),         # fused W1 (resident)
                pl.BlockSpec((1, h), lambda i: (0, 0)),             # b1
                pl.BlockSpec((h, h), lambda i: (0, 0)),             # W2
                pl.BlockSpec((1, h), lambda i: (0, 0)),             # b2
                pl.BlockSpec((1, h), lambda i: (0, 0)),             # w3 row
                pl.BlockSpec(memory_space=pltpu.MemorySpace.SMEM),  # b3 scalar
            ],
            out_specs=pl.BlockSpec((1, tb), lambda i: (0, i)),      # lane-dense slab
            scratch_shapes=[pltpu.VMEM((tb, k_pad), jnp.bfloat16)],
        ),
        compiler_params=pltpu.CompilerParams(
            dimension_semantics=("parallel",),
            vmem_limit_bytes=vmem_limit),
        cost_estimate=pl.CostEstimate(
            flops=flops, transcendentals=0, bytes_accessed=bytes_accessed),
    )(flat_obs, flat_act, w1_pad, b1r, w2b, b2r, w3r, b3r)

    return out[0, :].reshape(b, 1)


def init_params(key, input_dim, h_size=64, out_dim=1):
    """Deterministic parameter init (Kaiming-uniform-ish, like torch Linear)."""
    ks = jax.random.split(key, 6)

    def lin(kw, kb, fan_in, fan_out):
        bound = 1.0 / jnp.sqrt(jnp.float32(fan_in))
        w = jax.random.uniform(kw, (fan_in, fan_out), jnp.float32, -bound, bound)
        bb = jax.random.uniform(kb, (1, fan_out), jnp.float32, -bound, bound)
        return w, bb

    w1, b1 = lin(ks[0], ks[1], input_dim, h_size)
    w2, b2 = lin(ks[2], ks[3], h_size, h_size)
    w3, b3 = lin(ks[4], ks[5], h_size, out_dim)
    return (w1, b1, w2, b2, w3, b3)


def reference_forward(obs, act, params):
    """Pure-JAX f32 reference (exact module semantics, eval mode)."""
    b = obs.shape[0]
    x = jnp.concatenate([obs.reshape(b, -1), act.reshape(b, -1)], axis=1)
    w1, b1, w2, b2, w3, b3 = params
    h1 = _leaky_relu(x @ w1 + b1)
    h2 = _leaky_relu(h1 @ w2 + b2)
    return h2 @ w3 + b3


def reference_forward_mixed(obs, act, params):
    """Reference mimicking the kernel's bf16-MXU / f32-accumulate precision."""
    b = obs.shape[0]
    x = jnp.concatenate([obs.reshape(b, -1), act.reshape(b, -1)],
                        axis=1).astype(jnp.bfloat16)
    w1, b1, w2, b2, w3, b3 = params
    h1 = _leaky_relu(jnp.dot(x, w1.astype(jnp.bfloat16),
                             preferred_element_type=jnp.float32) + b1)
    h2 = _leaky_relu(jnp.dot(h1.astype(jnp.bfloat16), w2.astype(jnp.bfloat16),
                             preferred_element_type=jnp.float32) + b2)
    return jnp.dot(h2, w3, preferred_element_type=jnp.float32) + b3


if __name__ == "__main__":
    key = jax.random.PRNGKey(0)
    k_obs, k_act, k_par = jax.random.split(key, 3)

    # Small shapes consistent with the module: obs_shape=(2, 8, 8), act_shape=(8,)
    B = 8
    obs_shape = (2, 8, 8)   # prod = 128 -> MXU-aligned obs contraction
    act_shape = (8,)        # prod = 8
    h_size = 64
    input_dim = 128 + 8

    obs = jax.random.normal(k_obs, (B,) + obs_shape, jnp.float32)
    act = jax.random.normal(k_act, (B,) + act_shape, jnp.float32)
    params = init_params(k_par, input_dim, h_size=h_size, out_dim=1)

    y = fully_connected_mlp_forward(obs, act, params)
    y = jax.block_until_ready(y)
    assert y.shape == (B, 1), y.shape

    # Tight check vs a reference that uses the same bf16/f32 mixed precision.
    y_ref_mp = reference_forward_mixed(obs, act, params)
    assert jnp.allclose(y, y_ref_mp, atol=5e-3, rtol=5e-3), (y, y_ref_mp)

    # Loose sanity check vs the pure-f32 module semantics (bf16 quantization noise).
    y_ref = reference_forward(obs, act, params)
    assert jnp.allclose(y, y_ref, atol=5e-2, rtol=5e-2), (y, y_ref)

    print("KERNEL_OK")
</pallas_src>

<mosaic_0001>
module attributes {stable_mosaic.version = 11 : i64} {
  func.func @mlp_kernel(%arg0: i32, %arg1: memref<128x128xf32, #tpu.memory_space<vmem>>, %arg2: memref<128x8xf32, #tpu.memory_space<vmem>>, %arg3: memref<256x64xbf16, #tpu.memory_space<vmem>>, %arg4: memref<1x64xf32, #tpu.memory_space<vmem>>, %arg5: memref<64x64xbf16, #tpu.memory_space<vmem>>, %arg6: memref<1x64xf32, #tpu.memory_space<vmem>>, %arg7: memref<1x64xf32, #tpu.memory_space<vmem>>, %arg8: memref<1x1xf32, #tpu.memory_space<smem>>, %arg9: memref<1x128xf32, #tpu.memory_space<vmem>>, %arg10: memref<128x256xbf16, #tpu.memory_space<vmem>>) attributes {dimension_semantics = [#tpu.dimension_semantics<parallel>], iteration_bounds = array<i64: 1>, scalar_prefetch = 0 : i64, scratch_operands = 1 : i64, tpu.core_type = #tpu.core_type<tc>, window_params = [{transform_indices = @transform_0, window_bounds = array<i64: 128, 128>}, {transform_indices = @transform_1, window_bounds = array<i64: 128, 8>}, {pipeline_mode = #tpu.pipeline_mode<synchronous>, transform_indices = @transform_2, window_bounds = array<i64: 256, 64>}, {pipeline_mode = #tpu.pipeline_mode<synchronous>, transform_indices = @transform_3, window_bounds = array<i64: 1, 64>}, {pipeline_mode = #tpu.pipeline_mode<synchronous>, transform_indices = @transform_4, window_bounds = array<i64: 64, 64>}, {pipeline_mode = #tpu.pipeline_mode<synchronous>, transform_indices = @transform_5, window_bounds = array<i64: 1, 64>}, {pipeline_mode = #tpu.pipeline_mode<synchronous>, transform_indices = @transform_6, window_bounds = array<i64: 1, 64>}, {transform_indices = @transform_7, window_bounds = array<i64: 1, 1>}, {transform_indices = @transform_8, window_bounds = array<i64: 1, 128>}]} {
    %c0 = arith.constant 0 : index
    %c0_0 = arith.constant 0 : index
    %0 = vector.load %arg1[%c0, %c0_0] : memref<128x128xf32, #tpu.memory_space<vmem>>, vector<128x128xf32>
    %1 = arith.truncf %0 : vector<128x128xf32> to vector<128x128xbf16>
    %c0_1 = arith.constant 0 : index
    %c0_2 = arith.constant 0 : index
    %2 = vector.load %arg10[%c0_1, %c0_2] : memref<128x256xbf16, #tpu.memory_space<vmem>>, vector<128x128xbf16>
    tpu.vector_store %arg10[%c0_1, %c0_2], %1 {strides = array<i32>} : memref<128x256xbf16, #tpu.memory_space<vmem>>, vector<128x128xbf16>,
    %c0_3 = arith.constant 0 : index
    %c0_4 = arith.constant 0 : index
    %3 = vector.load %arg2[%c0_3, %c0_4] : memref<128x8xf32, #tpu.memory_space<vmem>>, vector<128x8xf32>
    %4 = arith.truncf %3 : vector<128x8xf32> to vector<128x8xbf16>
    %c0_5 = arith.constant 0 : index
    %c128 = arith.constant 128 : index
    %5 = vector.load %arg10[%c0_5, %c128] : memref<128x256xbf16, #tpu.memory_space<vmem>>, vector<128x8xbf16>
    tpu.vector_store %arg10[%c0_5, %c128], %4 {strides = array<i32>} : memref<128x256xbf16, #tpu.memory_space<vmem>>, vector<128x8xbf16>,
    %cst = arith.constant 0.000000e+00 : bf16
    %6 = vector.broadcast %cst : bf16 to vector<128x120xbf16>
    %c0_6 = arith.constant 0 : index
    %c136 = arith.constant 136 : index
    %7 = vector.load %arg10[%c0_6, %c136] : memref<128x256xbf16, #tpu.memory_space<vmem>>, vector<128x120xbf16>
    tpu.vector_store %arg10[%c0_6, %c136], %6 {strides = array<i32>} : memref<128x256xbf16, #tpu.memory_space<vmem>>, vector<128x120xbf16>,
    %c0_7 = arith.constant 0 : index
    %c0_8 = arith.constant 0 : index
    %8 = vector.load %arg10[%c0_7, %c0_8] : memref<128x256xbf16, #tpu.memory_space<vmem>>, vector<128x256xbf16>
    %c0_9 = arith.constant 0 : index
    %c0_10 = arith.constant 0 : index
    %9 = vector.load %arg3[%c0_9, %c0_10] : memref<256x64xbf16, #tpu.memory_space<vmem>>, vector<256x64xbf16>
    %cst_11 = arith.constant dense<0.000000e+00> : vector<128x64xf32>
    %10 = tpu.matmul %8, %9, %cst_11 {dimension_numbers = #tpu.dot_dimension_numbers<[1], [0], [0], [1], [0, 0, 1, 1], [], []>} : vector<128x256xbf16>, vector<256x64xbf16>, vector<128x64xf32> -> vector<128x64xf32>
    %c0_12 = arith.constant 0 : index
    %c0_13 = arith.constant 0 : index
    %11 = vector.load %arg4[%c0_12, %c0_13] : memref<1x64xf32, #tpu.memory_space<vmem>>, vector<1x64xf32>
    %12 = vector.broadcast %11 : vector<1x64xf32> to vector<128x64xf32>
    %13 = arith.addf %10, %12 : vector<128x64xf32>
    %cst_14 = arith.constant 0.000000e+00 : f32
    %14 = vector.broadcast %cst_14 : f32 to vector<128x64xf32>
    %15 = arith.cmpf ogt, %13, %14 : vector<128x64xf32>
    %cst_15 = arith.constant 0.00999999977 : f32
    %16 = vector.broadcast %cst_15 : f32 to vector<128x64xf32>
    %17 = arith.mulf %16, %13 : vector<128x64xf32>
    %18 = arith.select %15, %13, %17 : vector<128x64xi1>, vector<128x64xf32>
    %19 = arith.truncf %18 : vector<128x64xf32> to vector<128x64xbf16>
    %c0_16 = arith.constant 0 : index
    %c0_17 = arith.constant 0 : index
    %20 = vector.load %arg5[%c0_16, %c0_17] : memref<64x64xbf16, #tpu.memory_space<vmem>>, vector<64x64xbf16>
    %cst_18 = arith.constant dense<0.000000e+00> : vector<128x64xf32>
    %21 = tpu.matmul %19, %20, %cst_18 {dimension_numbers = #tpu.dot_dimension_numbers<[1], [0], [0], [1], [0, 0, 1, 1], [], []>} : vector<128x64xbf16>, vector<64x64xbf16>, vector<128x64xf32> -> vector<128x64xf32>
    %c0_19 = arith.constant 0 : index
    %c0_20 = arith.constant 0 : index
    %22 = vector.load %arg6[%c0_19, %c0_20] : memref<1x64xf32, #tpu.memory_space<vmem>>, vector<1x64xf32>
    %23 = vector.broadcast %22 : vector<1x64xf32> to vector<128x64xf32>
    %24 = arith.addf %21, %23 : vector<128x64xf32>
    %cst_21 = arith.constant 0.000000e+00 : f32
    %25 = vector.broadcast %cst_21 : f32 to vector<128x64xf32>
    %26 = arith.cmpf ogt, %24, %25 : vector<128x64xf32>
    %cst_22 = arith.constant 0.00999999977 : f32
    %27 = vector.broadcast %cst_22 : f32 to vector<128x64xf32>
    %28 = arith.mulf %27, %24 : vector<128x64xf32>
    %29 = arith.select %26, %24, %28 : vector<128x64xi1>, vector<128x64xf32>
    %c0_23 = arith.constant 0 : index
    %c0_24 = arith.constant 0 : index
    %30 = vector.load %arg7[%c0_23, %c0_24] : memref<1x64xf32, #tpu.memory_space<vmem>>, vector<1x64xf32>
    %cst_25 = arith.constant dense<0.000000e+00> : vector<1x128xf32>
    %31 = tpu.matmul %30, %29, %cst_25 {dimension_numbers = #tpu.dot_dimension_numbers<[1], [1], [0], [0], [0, 0, 1, 0], [], []>} : vector<1x64xf32>, vector<128x64xf32>, vector<1x128xf32> -> vector<1x128xf32>
    %c0_26 = arith.constant 0 : index
    %c0_27 = arith.constant 0 : index
    %32 = memref.load %arg8[%c0_26, %c0_27] : memref<1x1xf32, #tpu.memory_space<smem>>
    %33 = vector.broadcast %32 : f32 to vector<1x128xf32>
    %34 = arith.addf %31, %33 : vector<1x128xf32>
    %c0_28 = arith.constant 0 : index
    %c0_29 = arith.constant 0 : index
    %35 = vector.load %arg9[%c0_28, %c0_29] : memref<1x128xf32, #tpu.memory_space<vmem>>, vector<1x128xf32>
    tpu.vector_store %arg9[%c0_28, %c0_29], %34 {strides = array<i32>} : memref<1x128xf32, #tpu.memory_space<vmem>>, vector<1x128xf32>,
    return
  }
  func.func @transform_0(%arg0: i32) -> (i32, i32) {
    %c0_i32 = arith.constant 0 : i32
    %c0_i32_0 = arith.constant 0 : i32
    return %arg0, %c0_i32 : i32, i32
  }
  func.func @transform_1(%arg0: i32) -> (i32, i32) {
    %c0_i32 = arith.constant 0 : i32
    %c0_i32_0 = arith.constant 0 : i32
    return %arg0, %c0_i32 : i32, i32
  }
  func.func @transform_2(%arg0: i32) -> (i32, i32) {
    %c0_i32 = arith.constant 0 : i32
    %c0_i32_0 = arith.constant 0 : i32
    %c0_i32_1 = arith.constant 0 : i32
    return %c0_i32, %c0_i32_0 : i32, i32
  }
  func.func @transform_3(%arg0: i32) -> (i32, i32) {
    %c0_i32 = arith.constant 0 : i32
    %c0_i32_0 = arith.constant 0 : i32
    %c0_i32_1 = arith.constant 0 : i32
    return %c0_i32, %c0_i32_0 : i32, i32
  }
  func.func @transform_4(%arg0: i32) -> (i32, i32) {
    %c0_i32 = arith.constant 0 : i32
    %c0_i32_0 = arith.constant 0 : i32
    %c0_i32_1 = arith.constant 0 : i32
    return %c0_i32, %c0_i32_0 : i32, i32
  }
  func.func @transform_5(%arg0: i32) -> (i32, i32) {
    %c0_i32 = arith.constant 0 : i32
    %c0_i32_0 = arith.constant 0 : i32
    %c0_i32_1 = arith.constant 0 : i32
    return %c0_i32, %c0_i32_0 : i32, i32
  }
  func.func @transform_6(%arg0: i32) -> (i32, i32) {
    %c0_i32 = arith.constant 0 : i32
    %c0_i32_0 = arith.constant 0 : i32
    %c0_i32_1 = arith.constant 0 : i32
    return %c0_i32, %c0_i32_0 : i32, i32
  }
  func.func @transform_7(%arg0: i32) -> (i32, i32) {
    %c0_i32 = arith.constant 0 : i32
    %c0_i32_0 = arith.constant 0 : i32
    %c0_i32_1 = arith.constant 0 : i32
    return %c0_i32, %c0_i32_0 : i32, i32
  }
  func.func @transform_8(%arg0: i32) -> (i32, i32) {
    %c0_i32 = arith.constant 0 : i32
    %c0_i32_0 = arith.constant 0 : i32
    return %c0_i32, %arg0 : i32, i32
  }
}

</mosaic_0001>

<llo_original>
// kernel: fully_connected_mlp_forward.1
$region0: #{fully_connected_mlp_forward.1}
  #allocation0 [shape = 'u32[]', space=smem, size = 0x4, offset = 0x4, fixed_abs, tag = 'smem constant byte address 0x4 - core index']
  #allocation1 [shape = 'u32[144,128]{1,0:T(1,128)}', space=vmem, size = 0x12000, scoped, tag = 'internal scratch']
  #allocation2 [shape = 'bf16[128,256]{1,0:T(16,128)(2,1)}', space=vmem, size = 0x10000, scoped, tag = 'scratch operand']
  #allocation3 [shape = 'f32[1,1]{1,0:T(1,128)S(6)}', space=smem, size = 0x200, scoped, tag = 'scoped memory for fully_connected_mlp_forward.1']
  %s0 = inlined_call_operand.vmem [shape: f32[8,128], index: 0, kind: input, shape index: {}]
  %s1 = inlined_call_operand.vmem [shape: f32[8,8], index: 1, kind: input, shape index: {}]
  %s2 = inlined_call_operand.vmem [shape: bf16[256,64], index: 2, kind: input, shape index: {}]
  %s3 = inlined_call_operand.vmem [shape: f32[1,64], index: 3, kind: input, shape index: {}]
  %s4 = inlined_call_operand.vmem [shape: bf16[64,64], index: 4, kind: input, shape index: {}]
  %s5 = inlined_call_operand.vmem [shape: f32[1,64], index: 5, kind: input, shape index: {}]
  %s6 = inlined_call_operand.vmem [shape: f32[1,64], index: 6, kind: input, shape index: {}]
  %s7 = inlined_call_operand.<no memory space> [shape: f32[1,1], index: 7, kind: input, shape index: {}]
  %s8 = inlined_call_operand.hbm [shape: f32[1,8], index: 8, kind: output, shape index: {}]
  %s9 = sld [smem:[#allocation0]]
  $region42: #{fully_connected_mlp_forward.1} parent=0
    _
  %s11 = ssub.s32 1, %s9
  %s12 = scalar_select 0, %s11, %s9
  %13 = sst [smem:[#allocation3]] %s7
  $region1: #{fully_connected_mlp_forward.1} parent=0
    #allocation4 [shape = 'u8[512]{0}', space=vmem, size = 0x400, scoped, tag = 'output window, operand 0, single buffered']
    #allocation5 [shape = 's32[1]{0}', space=sflag, size = 0x4, scoped, tag = 'scoped memory for fully_connected_mlp_forward.1']
    %14 = vsyncpa [#allocation5], 0
    // Predicated region
    $region2: #{fully_connected_mlp_forward.1} parent=1 // pred_check
      _
    $region3: #{fully_connected_mlp_forward.1} parent=1 // pred_check_branch
      %16 = sbr.rel (0) target = $region5
    $region4: #{fully_connected_mlp_forward.1} parent=1 // pred_region
      _
    $region5: #{fully_connected_mlp_forward.1} parent=1 // pred_fallthru
      _
    // Predicated region
    $region6: #{fully_connected_mlp_forward.1} parent=1 // pred_check
      _
    $region7: #{fully_connected_mlp_forward.1} parent=1 // pred_check_branch
      %18 = sbr.rel (0) target = $region9
    $region8: #{fully_connected_mlp_forward.1} parent=1 // pred_region
      _
    $region9: #{fully_connected_mlp_forward.1} parent=1 // pred_fallthru
      _
    // Predicated region
    $region10: #{fully_connected_mlp_forward.1} parent=1 // pred_check
      _
    $region11: #{fully_connected_mlp_forward.1} parent=1 // pred_check_branch
      %20 = sbr.rel (0) target = $region13
    $region12: #{fully_connected_mlp_forward.1} parent=1 // pred_region
      _
    $region13: #{fully_connected_mlp_forward.1} parent=1 // pred_fallthru
      _
    // Predicated region
    $region14: #{fully_connected_mlp_forward.1} parent=1 // pred_check
      _
    $region15: #{fully_connected_mlp_forward.1} parent=1 // pred_check_branch
      %22 = sbr.rel (0) target = $region17
    $region16: #{fully_connected_mlp_forward.1} parent=1 // pred_region
      _
    $region17: #{fully_connected_mlp_forward.1} parent=1 // pred_fallthru
      _
    // Predicated region
    $region18: #{fully_connected_mlp_forward.1} parent=1 // pred_check
      _
    $region19: #{fully_connected_mlp_forward.1} parent=1 // pred_check_branch
      %24 = sbr.rel (0) target = $region21
    $region20: #{fully_connected_mlp_forward.1} parent=1 // pred_region
      _
    $region21: #{fully_connected_mlp_forward.1} parent=1 // pred_fallthru
      _
    // Predicated region
    $region22: #{fully_connected_mlp_forward.1} parent=1 // pred_check
      _
    $region23: #{fully_connected_mlp_forward.1} parent=1 // pred_check_branch
      %26 = sbr.rel (0) target = $region25
    $region24: #{fully_connected_mlp_forward.1} parent=1 // pred_region
      _
    $region25: #{fully_connected_mlp_forward.1} parent=1 // pred_fallthru
      _
    // Predicated region
    $region26: #{fully_connected_mlp_forward.1} parent=1 // pred_check
      _
    $region27: #{fully_connected_mlp_forward.1} parent=1 // pred_check_branch
      %28 = sbr.rel (0) target = $region29
    $region28: #{fully_connected_mlp_forward.1} parent=1 // pred_region
      _
    $region29: #{fully_connected_mlp_forward.1} parent=1 // pred_fallthru
      _
    // Predicated region
    $region30: #{fully_connected_mlp_forward.1} parent=1 // pred_check
      _
    $region31: #{fully_connected_mlp_forward.1} parent=1 // pred_check_branch
      %30 = sbr.rel (0) target = $region33
    $region32: #{fully_connected_mlp_forward.1} parent=1 // pred_region
      _
    $region33: #{fully_connected_mlp_forward.1} parent=1 // pred_fallthru
      _
    %v32 = vld [vmem:[%s0] sm:$0xff]
    %v33 = vld [vmem:[%s0 + $0x8] sm:$0xff]
    %v34 = vld [vmem:[%s0 + $0x10] sm:$0xff]
    %v35 = vld [vmem:[%s0 + $0x18] sm:$0xff]
    %v36 = vld [vmem:[%s0 + $0x20] sm:$0xff]
    %v37 = vld [vmem:[%s0 + $0x28] sm:$0xff]
    %v38 = vld [vmem:[%s0 + $0x30] sm:$0xff]
    %v39 = vld [vmem:[%s0 + $0x38] sm:$0xff]
    %v40 = vld [vmem:[%s0 + $0x40] sm:$0xff]
    %v41 = vld [vmem:[%s0 + $0x48] sm:$0xff]
    %v42 = vld [vmem:[%s0 + $0x50] sm:$0xff]
    %v43 = vld [vmem:[%s0 + $0x58] sm:$0xff]
    %v44 = vld [vmem:[%s0 + $0x60] sm:$0xff]
    %v45 = vld [vmem:[%s0 + $0x68] sm:$0xff]
    %v46 = vld [vmem:[%s0 + $0x70] sm:$0xff]
    %v47 = vld [vmem:[%s0 + $0x78] sm:$0xff]
    %v48 = vpack.c.bf16 %v33, %v32
    %v49 = vpack.c.bf16 %v35, %v34
    %v50 = vpack.c.bf16 %v37, %v36
    %v51 = vpack.c.bf16 %v39, %v38
    %v52 = vpack.c.bf16 %v41, %v40
    %v53 = vpack.c.bf16 %v43, %v42
    %v54 = vpack.c.bf16 %v45, %v44
    %v55 = vpack.c.bf16 %v47, %v46
    %56 = vst [vmem:[#allocation2] sm:$0xff] %v48
    %57 = vst [vmem:[#allocation2 + $0x10] sm:$0xff] %v49
    %58 = vst [vmem:[#allocation2 + $0x20] sm:$0xff] %v50
    %59 = vst [vmem:[#allocation2 + $0x30] sm:$0xff] %v51
    %60 = vst [vmem:[#allocation2 + $0x40] sm:$0xff] %v52
    %61 = vst [vmem:[#allocation2 + $0x50] sm:$0xff] %v53
    %62 = vst [vmem:[#allocation2 + $0x60] sm:$0xff] %v54
    %63 = vst [vmem:[#allocation2 + $0x70] sm:$0xff] %v55
    %v64 = vld [vmem:[%s1] sm:$0xff]
    %v65 = vld [vmem:[%s1 + $0x8] sm:$0xff]
    %v66 = vld [vmem:[%s1 + $0x10] sm:$0xff]
    %v67 = vld [vmem:[%s1 + $0x18] sm:$0xff]
    %v68 = vld [vmem:[%s1 + $0x20] sm:$0xff]
    %v69 = vld [vmem:[%s1 + $0x28] sm:$0xff]
    %v70 = vld [vmem:[%s1 + $0x30] sm:$0xff]
    %v71 = vld [vmem:[%s1 + $0x38] sm:$0xff]
    %v72 = vld [vmem:[%s1 + $0x40] sm:$0xff]
    %v73 = vld [vmem:[%s1 + $0x48] sm:$0xff]
    %v74 = vld [vmem:[%s1 + $0x50] sm:$0xff]
    %v75 = vld [vmem:[%s1 + $0x58] sm:$0xff]
    %v76 = vld [vmem:[%s1 + $0x60] sm:$0xff]
    %v77 = vld [vmem:[%s1 + $0x68] sm:$0xff]
    %v78 = vld [vmem:[%s1 + $0x70] sm:$0xff]
    %v79 = vld [vmem:[%s1 + $0x78] sm:$0xff]
    %v80 = vpack.c.bf16 %v65, %v64
    %v81 = vpack.c.bf16 %v67, %v66
    %v82 = vpack.c.bf16 %v69, %v68
    %v83 = vpack.c.bf16 %v71, %v70
    %v84 = vpack.c.bf16 %v73, %v72
    %v85 = vpack.c.bf16 %v75, %v74
    %v86 = vpack.c.bf16 %v77, %v76
    %v87 = vpack.c.bf16 %v79, %v78
    %vm88 = vcmask 64512
    %89 = vst.msk [vmem:[#allocation2 + $0x8] sm:$0xff] %vm88, %v80
    %90 = vst.msk [vmem:[#allocation2 + $0x18] sm:$0xff] %vm88, %v81
    %91 = vst.msk [vmem:[#allocation2 + $0x28] sm:$0xff] %vm88, %v82
    %92 = vst.msk [vmem:[#allocation2 + $0x38] sm:$0xff] %vm88, %v83
    %93 = vst.msk [vmem:[#allocation2 + $0x48] sm:$0xff] %vm88, %v84
    %94 = vst.msk [vmem:[#allocation2 + $0x58] sm:$0xff] %vm88, %v85
    %95 = vst.msk [vmem:[#allocation2 + $0x68] sm:$0xff] %vm88, %v86
    %96 = vst.msk [vmem:[#allocation2 + $0x78] sm:$0xff] %vm88, %v87
    %vm97 = vcmask 1047616
    %98 = vst.msk [vmem:[#allocation2 + $0x8] sm:$0xff] %vm97, 0
    %99 = vst.msk [vmem:[#allocation2 + $0x18] sm:$0xff] %vm97, 0
    %100 = vst.msk [vmem:[#allocation2 + $0x28] sm:$0xff] %vm97, 0
    %101 = vst.msk [vmem:[#allocation2 + $0x38] sm:$0xff] %vm97, 0
    %102 = vst.msk [vmem:[#allocation2 + $0x48] sm:$0xff] %vm97, 0
    %103 = vst.msk [vmem:[#allocation2 + $0x58] sm:$0xff] %vm97, 0
    %104 = vst.msk [vmem:[#allocation2 + $0x68] sm:$0xff] %vm97, 0
    %105 = vst.msk [vmem:[#allocation2 + $0x78] sm:$0xff] %vm97, 0
    %v106 = vld [vmem:[#allocation2] sm:$0xff]
    %v107 = vld [vmem:[#allocation2 + $0x8] sm:$0xff]
    %v108 = vld [vmem:[#allocation2 + $0x10] sm:$0xff]
    %v109 = vld [vmem:[#allocation2 + $0x18] sm:$0xff]
    %v110 = vld [vmem:[#allocation2 + $0x20] sm:$0xff]
    %v111 = vld [vmem:[#allocation2 + $0x28] sm:$0xff]
    %v112 = vld [vmem:[#allocation2 + $0x30] sm:$0xff]
    %v113 = vld [vmem:[#allocation2 + $0x38] sm:$0xff]
    %v114 = vld [vmem:[#allocation2 + $0x40] sm:$0xff]
    %v115 = vld [vmem:[#allocation2 + $0x48] sm:$0xff]
    %v116 = vld [vmem:[#allocation2 + $0x50] sm:$0xff]
    %v117 = vld [vmem:[#allocation2 + $0x58] sm:$0xff]
    %v118 = vld [vmem:[#allocation2 + $0x60] sm:$0xff]
    %v119 = vld [vmem:[#allocation2 + $0x68] sm:$0xff]
    %v120 = vld [vmem:[#allocation2 + $0x70] sm:$0xff]
    %v121 = vld [vmem:[#allocation2 + $0x78] sm:$0xff]
    %v122 = vld [vmem:[%s2] sm:$0xf]
    %v123 = vld [vmem:[%s2 + $0x4] sm:$0xf]
    %v124 = vld [vmem:[%s2 + $0x8] sm:$0xf]
    %v125 = vld [vmem:[%s2 + $0xc] sm:$0xf]
    %v126 = vld [vmem:[%s2 + $0x10] sm:$0xf]
    %v127 = vld [vmem:[%s2 + $0x14] sm:$0xf]
    %v128 = vld [vmem:[%s2 + $0x18] sm:$0xf]
    %v129 = vld [vmem:[%s2 + $0x1c] sm:$0xf]
    %v130 = vld [vmem:[%s2 + $0x20] sm:$0xf]
    %v131 = vld [vmem:[%s2 + $0x24] sm:$0xf]
    %v132 = vld [vmem:[%s2 + $0x28] sm:$0xf]
    %v133 = vld [vmem:[%s2 + $0x2c] sm:$0xf]
    %v134 = vld [vmem:[%s2 + $0x30] sm:$0xf]
    %v135 = vld [vmem:[%s2 + $0x34] sm:$0xf]
    %v136 = vld [vmem:[%s2 + $0x38] sm:$0xf]
    %v137 = vld [vmem:[%s2 + $0x3c] sm:$0xf]
    %v138 = vld [vmem:[%s2 + $0x40] sm:$0xf]
    %v139 = vld [vmem:[%s2 + $0x44] sm:$0xf]
    %v140 = vld [vmem:[%s2 + $0x48] sm:$0xf]
    %v141 = vld [vmem:[%s2 + $0x4c] sm:$0xf]
    %v142 = vld [vmem:[%s2 + $0x50] sm:$0xf]
    %v143 = vld [vmem:[%s2 + $0x54] sm:$0xf]
    %v144 = vld [vmem:[%s2 + $0x58] sm:$0xf]
    %v145 = vld [vmem:[%s2 + $0x5c] sm:$0xf]
    %v146 = vld [vmem:[%s2 + $0x60] sm:$0xf]
    %v147 = vld [vmem:[%s2 + $0x64] sm:$0xf]
    %v148 = vld [vmem:[%s2 + $0x68] sm:$0xf]
    %v149 = vld [vmem:[%s2 + $0x6c] sm:$0xf]
    %v150 = vld [vmem:[%s2 + $0x70] sm:$0xf]
    %v151 = vld [vmem:[%s2 + $0x74] sm:$0xf]
    %v152 = vld [vmem:[%s2 + $0x78] sm:$0xf]
    %v153 = vld [vmem:[%s2 + $0x7c] sm:$0xf]
    %v154 = vld [vmem:[%s3] sm:$0x1]
    %v156 = vlaneseq
    %v157 = vshrl.u32 %v156, 7
    %v158 = vsub.s32 0, %v157
    %v159 = vrot.slane %v154, %v158
    %v193 = vunpack.c.l.b16 %v122
    %v194 = vunpack.c.l.b16 %v123
    %v195 = vunpack.c.l.b16 %v124
    %v196 = vunpack.c.l.b16 %v125
    %v197 = vunpack.c.l.b16 %v126
    %v198 = vunpack.c.l.b16 %v127
    %v199 = vunpack.c.l.b16 %v128
    %v200 = vunpack.c.l.b16 %v129
    %v201 = vunpack.c.l.b16 %v130
    %v202 = vunpack.c.l.b16 %v131
    %v203 = vunpack.c.l.b16 %v132
    %v204 = vunpack.c.l.b16 %v133
    %v205 = vunpack.c.l.b16 %v134
    %v206 = vunpack.c.l.b16 %v135
    %v207 = vunpack.c.l.b16 %v136
    %v208 = vunpack.c.l.b16 %v137
    %v209 = vunpack.c.l.b16 %v138
    %v210 = vunpack.c.l.b16 %v139
    %v211 = vunpack.c.l.b16 %v140
    %v212 = vunpack.c.l.b16 %v141
    %v213 = vunpack.c.l.b16 %v142
    %v214 = vunpack.c.l.b16 %v143
    %v215 = vunpack.c.l.b16 %v144
    %v216 = vunpack.c.l.b16 %v145
    %v217 = vunpack.c.l.b16 %v146
    %v218 = vunpack.c.l.b16 %v147
    %v219 = vunpack.c.l.b16 %v148
    %v220 = vunpack.c.l.b16 %v149
    %v221 = vunpack.c.l.b16 %v150
    %v222 = vunpack.c.l.b16 %v151
    %v223 = vunpack.c.l.b16 %v152
    %v224 = vunpack.c.l.b16 %v153
    %v225 = vpack.c.b16 %v194, %v193
    %v226 = vpack.c.b16 %v196, %v195
    %v227 = vpack.c.b16 %v198, %v197
    %v228 = vpack.c.b16 %v200, %v199
    %v229 = vpack.c.b16 %v202, %v201
    %v230 = vpack.c.b16 %v204, %v203
    %v231 = vpack.c.b16 %v206, %v205
    %v232 = vpack.c.b16 %v208, %v207
    %v233 = vpack.c.b16 %v210, %v209
    %v234 = vpack.c.b16 %v212, %v211
    %v235 = vpack.c.b16 %v214, %v213
    %v236 = vpack.c.b16 %v216, %v215
    %v237 = vpack.c.b16 %v218, %v217
    %v238 = vpack.c.b16 %v220, %v219
    %v239 = vpack.c.b16 %v222, %v221
    %v240 = vpack.c.b16 %v224, %v223
    %257 = vmatprep.subr.bf16.mxu0 0
    %258 = vmatpush1.bf16.msra.mxu0 %v225
    %259 = vmatprep.subr.bf16.mxu0 0
    %260 = vmatpush1.bf16.msra.mxu0 %v226
    %261 = vmatprep.subr.bf16.mxu0 0
    %262 = vmatpush1.bf16.msra.mxu0 %v227
    %263 = vmatprep.subr.bf16.mxu0 0
    %264 = vmatpush1.bf16.msra.mxu0 %v228
    %265 = vmatprep.subr.bf16.mxu0 0
    %266 = vmatpush1.bf16.msra.mxu0 %v229
    %267 = vmatprep.subr.bf16.mxu0 0
    %268 = vmatpush1.bf16.msra.mxu0 %v230
    %269 = vmatprep.subr.bf16.mxu0 0
    %270 = vmatpush1.bf16.msra.mxu0 %v231
    %271 = vmatprep.subr.bf16.mxu0 0
    %272 = vmatpush1.bf16.msra.mxu0 %v232
    %273 = vmatprep.subr.bf16.mxu0 0
    %274 = vmatpush1.bf16.msra.mxu0 %v233
    %275 = vmatprep.subr.bf16.mxu0 0
    %276 = vmatpush1.bf16.msra.mxu0 %v234
    %277 = vmatprep.subr.bf16.mxu0 0
    %278 = vmatpush1.bf16.msra.mxu0 %v235
    %279 = vmatprep.subr.bf16.mxu0 0
    %280 = vmatpush1.bf16.msra.mxu0 %v236
    %281 = vmatprep.subr.bf16.mxu0 0
    %282 = vmatpush1.bf16.msra.mxu0 %v237
    %283 = vmatprep.subr.bf16.mxu0 0
    %284 = vmatpush1.bf16.msra.mxu0 %v238
    %285 = vmatprep.subr.bf16.mxu0 0
    %286 = vmatpush1.bf16.msra.mxu0 %v239
    %287 = vmatprep.subr.bf16.mxu0 0
    %288 = vmatpush1.bf16.msra.mxu0 %v240
    %289 = vmatprep.mubr.bf16.mxu0 %v107
    %290 = vmatmul.mubr.bf16.gmra.mrb[0].mxu0 %v106
    %v291 = vpop.f32.mrb[0].mxu0
    %v292 = vadd.f32 %v159, %v291
    %v293 = vpop.f32.mrb[0].mxu0
    %v294 = vpop.f32.mrb[0].mxu0
    %v295 = vadd.f32 %v159, %v294
    %v296 = vpop.f32.mrb[0].mxu0
    %297 = vmatprep.mubr.bf16.mxu0 %v109
    %298 = vmatmul.mubr.bf16.gmra.mrb[0].mxu0 %v108
    %v299 = vpop.f32.mrb[0].mxu0
    %v300 = vadd.f32 %v159, %v299
    %v301 = vpop.f32.mrb[0].mxu0
    %v302 = vpop.f32.mrb[0].mxu0
    %v303 = vadd.f32 %v159, %v302
    %v304 = vpop.f32.mrb[0].mxu0
    %305 = vmatprep.mubr.bf16.mxu0 %v111
    %306 = vmatmul.mubr.bf16.gmra.mrb[0].mxu0 %v110
    %v307 = vpop.f32.mrb[0].mxu0
    %v308 = vadd.f32 %v159, %v307
    %v309 = vpop.f32.mrb[0].mxu0
    %v310 = vpop.f32.mrb[0].mxu0
    %v311 = vadd.f32 %v159, %v310
    %v312 = vpop.f32.mrb[0].mxu0
    %313 = vmatprep.mubr.bf16.mxu0 %v113
    %314 = vmatmul.mubr.bf16.gmra.mrb[0].mxu0 %v112
    %v315 = vpop.f32.mrb[0].mxu0
    %v316 = vadd.f32 %v159, %v315
    %v317 = vpop.f32.mrb[0].mxu0
    %v318 = vpop.f32.mrb[0].mxu0
    %v319 = vadd.f32 %v159, %v318
    %v320 = vpop.f32.mrb[0].mxu0
    %321 = vmatprep.mubr.bf16.mxu0 %v115
    %322 = vmatmul.mubr.bf16.gmra.mrb[0].mxu0 %v114
    %v323 = vpop.f32.mrb[0].mxu0
    %v324 = vadd.f32 %v159, %v323
    %v325 = vpop.f32.mrb[0].mxu0
    %v326 = vpop.f32.mrb[0].mxu0
    %v327 = vadd.f32 %v159, %v326
    %v328 = vpop.f32.mrb[0].mxu0
    %329 = vmatprep.mubr.bf16.mxu0 %v117
    %330 = vmatmul.mubr.bf16.gmra.mrb[0].mxu0 %v116
    %v331 = vpop.f32.mrb[0].mxu0
    %v332 = vadd.f32 %v159, %v331
    %v333 = vpop.f32.mrb[0].mxu0
    %v334 = vpop.f32.mrb[0].mxu0
    %v335 = vadd.f32 %v159, %v334
    %v336 = vpop.f32.mrb[0].mxu0
    %337 = vmatprep.mubr.bf16.mxu0 %v119
    %338 = vmatmul.mubr.bf16.gmra.mrb[0].mxu0 %v118
    %v339 = vpop.f32.mrb[0].mxu0
    %v340 = vadd.f32 %v159, %v339
    %v341 = vpop.f32.mrb[0].mxu0
    %v342 = vpop.f32.mrb[0].mxu0
    %v343 = vadd.f32 %v159, %v342
    %v344 = vpop.f32.mrb[0].mxu0
    %345 = vmatprep.mubr.bf16.mxu0 %v121
    %346 = vmatmul.mubr.bf16.gmra.mrb[0].mxu0 %v120
    %v347 = vpop.f32.mrb[0].mxu0
    %v348 = vadd.f32 %v159, %v347
    %v349 = vpop.f32.mrb[0].mxu0
    %v350 = vpop.f32.mrb[0].mxu0
    %v351 = vadd.f32 %v159, %v350
    %v352 = vpop.f32.mrb[0].mxu0
    %353 = vdwg.mxu0
    %vm354 = vcmp.gt.f32.partialorder %v292, 0.0
    %vm355 = vcmp.gt.f32.partialorder %v295, 0.0
    %vm356 = vcmp.gt.f32.partialorder %v300, 0.0
    %vm357 = vcmp.gt.f32.partialorder %v303, 0.0
    %vm358 = vcmp.gt.f32.partialorder %v308, 0.0
    %vm359 = vcmp.gt.f32.partialorder %v311, 0.0
    %vm360 = vcmp.gt.f32.partialorder %v316, 0.0
    %vm361 = vcmp.gt.f32.partialorder %v319, 0.0
    %vm362 = vcmp.gt.f32.partialorder %v324, 0.0
    %vm363 = vcmp.gt.f32.partialorder %v327, 0.0
    %vm364 = vcmp.gt.f32.partialorder %v332, 0.0
    %vm365 = vcmp.gt.f32.partialorder %v335, 0.0
    %vm366 = vcmp.gt.f32.partialorder %v340, 0.0
    %vm367 = vcmp.gt.f32.partialorder %v343, 0.0
    %vm368 = vcmp.gt.f32.partialorder %v348, 0.0
    %vm369 = vcmp.gt.f32.partialorder %v351, 0.0
    %v370 = vmul.f32 %v292, 0.01
    %v371 = vmul.f32 %v295, 0.01
    %v372 = vmul.f32 %v300, 0.01
    %v373 = vmul.f32 %v303, 0.01
    %v374 = vmul.f32 %v308, 0.01
    %v375 = vmul.f32 %v311, 0.01
    %v376 = vmul.f32 %v316, 0.01
    %v377 = vmul.f32 %v319, 0.01
    %v378 = vmul.f32 %v324, 0.01
    %v379 = vmul.f32 %v327, 0.01
    %v380 = vmul.f32 %v332, 0.01
    %v381 = vmul.f32 %v335, 0.01
    %v382 = vmul.f32 %v340, 0.01
    %v383 = vmul.f32 %v343, 0.01
    %v384 = vmul.f32 %v348, 0.01
    %v385 = vmul.f32 %v351, 0.01
    %v386 = vsel %vm354, %v292, %v370
    %v387 = vsel %vm355, %v295, %v371
    %v388 = vsel %vm356, %v300, %v372
    %v389 = vsel %vm357, %v303, %v373
    %v390 = vsel %vm358, %v308, %v374
    %v391 = vsel %vm359, %v311, %v375
    %v392 = vsel %vm360, %v316, %v376
    %v393 = vsel %vm361, %v319, %v377
    %v394 = vsel %vm362, %v324, %v378
    %v395 = vsel %vm363, %v327, %v379
    %v396 = vsel %vm364, %v332, %v380
    %v397 = vsel %vm365, %v335, %v381
    %v398 = vsel %vm366, %v340, %v382
    %v399 = vsel %vm367, %v343, %v383
    %v400 = vsel %vm368, %v348, %v384
    %v401 = vsel %vm369, %v351, %v385
    %v402 = vpack.c.bf16 %v387, %v386
    %v403 = vpack.c.bf16 %v389, %v388
    %v404 = vpack.c.bf16 %v391, %v390
    %v405 = vpack.c.bf16 %v393, %v392
    %v406 = vpack.c.bf16 %v395, %v394
    %v407 = vpack.c.bf16 %v397, %v396
    %v408 = vpack.c.bf16 %v399, %v398
    %v409 = vpack.c.bf16 %v401, %v400
    %v410 = vld [vmem:[%s4] sm:$0xf]
    %v411 = vld [vmem:[%s4 + $0x4] sm:$0xf]
    %v412 = vld [vmem:[%s4 + $0x8] sm:$0xf]
    %v413 = vld [vmem:[%s4 + $0xc] sm:$0xf]
    %v414 = vld [vmem:[%s4 + $0x10] sm:$0xf]
    %v415 = vld [vmem:[%s4 + $0x14] sm:$0xf]
    %v416 = vld [vmem:[%s4 + $0x18] sm:$0xf]
    %v417 = vld [vmem:[%s4 + $0x1c] sm:$0xf]
    %v418 = vld [vmem:[%s5] sm:$0x1]
    %v420 = vlaneseq
    %v421 = vshrl.u32 %v420, 7
    %v422 = vsub.s32 0, %v421
    %v423 = vrot.slane %v418, %v422
    %v433 = vunpack.c.l.b16 %v410
    %v434 = vunpack.c.l.b16 %v411
    %v435 = vunpack.c.l.b16 %v412
    %v436 = vunpack.c.l.b16 %v413
    %v437 = vunpack.c.l.b16 %v414
    %v438 = vunpack.c.l.b16 %v415
    %v439 = vunpack.c.l.b16 %v416
    %v440 = vunpack.c.l.b16 %v417
    %v441 = vpack.c.b16 %v434, %v433
    %v442 = vpack.c.b16 %v436, %v435
    %v443 = vpack.c.b16 %v438, %v437
    %v444 = vpack.c.b16 %v440, %v439
    %vm449 = vcmask 523264
    %v451 = vsel %vm449, %v402, 0
    %v454 = vsel %vm449, %v403, 0
    %v457 = vsel %vm449, %v404, 0
    %v460 = vsel %vm449, %v405, 0
    %v463 = vsel %vm449, %v406, 0
    %v466 = vsel %vm449, %v407, 0
    %v469 = vsel %vm449, %v408, 0
    %v472 = vsel %vm449, %v409, 0
    %474 = vmatprep.subr.bf16.mxu0 0
    %475 = vmatpush1.bf16.msra.mxu0 %v441
    %476 = vmatprep.subr.bf16.mxu0 0
    %477 = vmatpush1.bf16.msra.mxu0 %v442
    %478 = vmatprep.subr.bf16.mxu0 0
    %479 = vmatpush1.bf16.msra.mxu0 %v443
    %480 = vmatprep.subr.bf16.mxu0 0
    %481 = vmatpush1.bf16.msra.mxu0 %v444
    %482 = vmatprep.subr.bf16.mxu0 0
    %483 = vmatpush1.bf16.msra.mxu0 0
    %484 = vmatprep.subr.bf16.mxu0 0
    %485 = vmatpush1.bf16.msra.mxu0 0
    %486 = vmatprep.subr.bf16.mxu0 0
    %487 = vmatpush1.bf16.msra.mxu0 0
    %488 = vmatprep.subr.bf16.mxu0 0
    %489 = vmatpush1.bf16.msra.mxu0 0
    %490 = vmatprep.subr.bf16.mxu0 0
    %491 = vmatpush1.bf16.msra.mxu0 0
    %492 = vmatprep.subr.bf16.mxu0 0
    %493 = vmatpush1.bf16.msra.mxu0 0
    %494 = vmatprep.subr.bf16.mxu0 0
    %495 = vmatpush1.bf16.msra.mxu0 0
    %496 = vmatprep.subr.bf16.mxu0 0
    %497 = vmatpush1.bf16.msra.mxu0 0
    %498 = vmatprep.subr.bf16.mxu0 0
    %499 = vmatpush1.bf16.msra.mxu0 0
    %500 = vmatprep.subr.bf16.mxu0 0
    %501 = vmatpush1.bf16.msra.mxu0 0
    %502 = vmatprep.subr.bf16.mxu0 0
    %503 = vmatpush1.bf16.msra.mxu0 0
    %504 = vmatprep.subr.bf16.mxu0 0
    %505 = vmatpush1.bf16.msra.mxu0 0
    %506 = vmatprep.mubr.bf16.mxu0 0
    %507 = vmatmul.mubr.bf16.gmra.mrb[0].mxu0 %v451
    %v508 = vpop.f32.mrb[0].mxu0
    %v509 = vadd.f32 %v423, %v508
    %v510 = vpop.f32.mrb[0].mxu0
    %v511 = vpop.f32.mrb[0].mxu0
    %v512 = vadd.f32 %v423, %v511
    %v513 = vpop.f32.mrb[0].mxu0
    %514 = vmatprep.mubr.bf16.mxu0 0
    %515 = vmatmul.mubr.bf16.gmra.mrb[0].mxu0 %v454
    %v516 = vpop.f32.mrb[0].mxu0
    %v517 = vadd.f32 %v423, %v516
    %v518 = vpop.f32.mrb[0].mxu0
    %v519 = vpop.f32.mrb[0].mxu0
    %v520 = vadd.f32 %v423, %v519
    %v521 = vpop.f32.mrb[0].mxu0
    %522 = vmatprep.mubr.bf16.mxu0 0
    %523 = vmatmul.mubr.bf16.gmra.mrb[0].mxu0 %v457
    %v524 = vpop.f32.mrb[0].mxu0
    %v525 = vadd.f32 %v423, %v524
    %v526 = vpop.f32.mrb[0].mxu0
    %v527 = vpop.f32.mrb[0].mxu0
    %v528 = vadd.f32 %v423, %v527
    %v529 = vpop.f32.mrb[0].mxu0
    %530 = vmatprep.mubr.bf16.mxu0 0
    %531 = vmatmul.mubr.bf16.gmra.mrb[0].mxu0 %v460
    %v532 = vpop.f32.mrb[0].mxu0
    %v533 = vadd.f32 %v423, %v532
    %v534 = vpop.f32.mrb[0].mxu0
    %v535 = vpop.f32.mrb[0].mxu0
    %v536 = vadd.f32 %v423, %v535
    %v537 = vpop.f32.mrb[0].mxu0
    %538 = vmatprep.mubr.bf16.mxu0 0
    %539 = vmatmul.mubr.bf16.gmra.mrb[0].mxu0 %v463
    %v540 = vpop.f32.mrb[0].mxu0
    %v541 = vadd.f32 %v423, %v540
    %v542 = vpop.f32.mrb[0].mxu0
    %v543 = vpop.f32.mrb[0].mxu0
    %v544 = vadd.f32 %v423, %v543
    %v545 = vpop.f32.mrb[0].mxu0
    %546 = vmatprep.mubr.bf16.mxu0 0
    %547 = vmatmul.mubr.bf16.gmra.mrb[0].mxu0 %v466
    %v548 = vpop.f32.mrb[0].mxu0
    %v549 = vadd.f32 %v423, %v548
    %v550 = vpop.f32.mrb[0].mxu0
    %v551 = vpop.f32.mrb[0].mxu0
    %v552 = vadd.f32 %v423, %v551
    %v553 = vpop.f32.mrb[0].mxu0
    %554 = vmatprep.mubr.bf16.mxu0 0
    %555 = vmatmul.mubr.bf16.gmra.mrb[0].mxu0 %v469
    %v556 = vpop.f32.mrb[0].mxu0
    %v557 = vadd.f32 %v423, %v556
    %v558 = vpop.f32.mrb[0].mxu0
    %v559 = vpop.f32.mrb[0].mxu0
    %v560 = vadd.f32 %v423, %v559
    %v561 = vpop.f32.mrb[0].mxu0
    %562 = vmatprep.mubr.bf16.mxu0 0
    %563 = vmatmul.mubr.bf16.gmra.mrb[0].mxu0 %v472
    %v564 = vpop.f32.mrb[0].mxu0
    %v565 = vadd.f32 %v423, %v564
    %v566 = vpop.f32.mrb[0].mxu0
    %v567 = vpop.f32.mrb[0].mxu0
    %v568 = vadd.f32 %v423, %v567
    %v569 = vpop.f32.mrb[0].mxu0
    %570 = vdwg.mxu0
    %vm571 = vcmp.gt.f32.partialorder %v509, 0.0
    %vm572 = vcmp.gt.f32.partialorder %v512, 0.0
    %vm573 = vcmp.gt.f32.partialorder %v517, 0.0
    %vm574 = vcmp.gt.f32.partialorder %v520, 0.0
    %vm575 = vcmp.gt.f32.partialorder %v525, 0.0
    %vm576 = vcmp.gt.f32.partialorder %v528, 0.0
    %vm577 = vcmp.gt.f32.partialorder %v533, 0.0
    %vm578 = vcmp.gt.f32.partialorder %v536, 0.0
    %vm579 = vcmp.gt.f32.partialorder %v541, 0.0
    %vm580 = vcmp.gt.f32.partialorder %v544, 0.0
    %vm581 = vcmp.gt.f32.partialorder %v549, 0.0
    %vm582 = vcmp.gt.f32.partialorder %v552, 0.0
    %vm583 = vcmp.gt.f32.partialorder %v557, 0.0
    %vm584 = vcmp.gt.f32.partialorder %v560, 0.0
    %vm585 = vcmp.gt.f32.partialorder %v565, 0.0
    %vm586 = vcmp.gt.f32.partialorder %v568, 0.0
    %v587 = vmul.f32 %v509, 0.01
    %v588 = vmul.f32 %v512, 0.01
    %v589 = vmul.f32 %v517, 0.01
    %v590 = vmul.f32 %v520, 0.01
    %v591 = vmul.f32 %v525, 0.01
    %v592 = vmul.f32 %v528, 0.01
    %v593 = vmul.f32 %v533, 0.01
    %v594 = vmul.f32 %v536, 0.01
    %v595 = vmul.f32 %v541, 0.01
    %v596 = vmul.f32 %v544, 0.01
    %v597 = vmul.f32 %v549, 0.01
    %v598 = vmul.f32 %v552, 0.01
    %v599 = vmul.f32 %v557, 0.01
    %v600 = vmul.f32 %v560, 0.01
    %v601 = vmul.f32 %v565, 0.01
    %v602 = vmul.f32 %v568, 0.01
    %v603 = vsel %vm571, %v509, %v587
    %v604 = vsel %vm572, %v512, %v588
    %v605 = vsel %vm573, %v517, %v589
    %v606 = vsel %vm574, %v520, %v590
    %v607 = vsel %vm575, %v525, %v591
    %v608 = vsel %vm576, %v528, %v592
    %v609 = vsel %vm577, %v533, %v593
    %v610 = vsel %vm578, %v536, %v594
    %v611 = vsel %vm579, %v541, %v595
    %v612 = vsel %vm580, %v544, %v596
    %v613 = vsel %vm581, %v549, %v597
    %v614 = vsel %vm582, %v552, %v598
    %v615 = vsel %vm583, %v557, %v599
    %v616 = vsel %vm584, %v560, %v600
    %v617 = vsel %vm585, %v565, %v601
    %v618 = vsel %vm586, %v568, %v602
    %v619 = vld [vmem:[%s6] sm:$0x1]
    %s620 = sld [smem:[#allocation3]]
    %v621 = vstv %s620
    %v623 = vsel %vm449, %v619, 0
    %v626 = vsel %vm449, %v603, 0
    %v629 = vsel %vm449, %v604, 0
    %v632 = vsel %vm449, %v605, 0
    %v635 = vsel %vm449, %v606, 0
    %v638 = vsel %vm449, %v607, 0
    %v641 = vsel %vm449, %v608, 0
    %v644 = vsel %vm449, %v609, 0
    %v647 = vsel %vm449, %v610, 0
    %v650 = vsel %vm449, %v611, 0
    %v653 = vsel %vm449, %v612, 0
    %v656 = vsel %vm449, %v613, 0
    %v659 = vsel %vm449, %v614, 0
    %v662 = vsel %vm449, %v615, 0
    %v665 = vsel %vm449, %v616, 0
    %v668 = vsel %vm449, %v617, 0
    %v671 = vsel %vm449, %v618, 0
    %673 = vmatprep.subr.mxu0 0.0
    %674 = vmatpush1.xpose.msra.mxu0 %v626
    %675 = vmatprep.subr.mxu0 0.0
    %676 = vmatpush1.xpose.msra.mxu0 %v629
    %677 = vmatprep.subr.mxu0 0.0
    %678 = vmatpush1.xpose.msra.mxu0 %v632
    %679 = vmatprep.subr.mxu0 0.0
    %680 = vmatpush1.xpose.msra.mxu0 %v635
    %681 = vmatprep.subr.mxu0 0.0
    %682 = vmatpush1.xpose.msra.mxu0 %v638
    %683 = vmatprep.subr.mxu0 0.0
    %684 = vmatpush1.xpose.msra.mxu0 %v641
    %685 = vmatprep.subr.mxu0 0.0
    %686 = vmatpush1.xpose.msra.mxu0 %v644
    %687 = vmatprep.subr.mxu0 0.0
    %688 = vmatpush1.xpose.msra.mxu0 %v647
    %689 = vmatprep.subr.mxu0 0.0
    %690 = vmatpush1.xpose.msra.mxu0 %v650
    %691 = vmatprep.subr.mxu0 0.0
    %692 = vmatpush1.xpose.msra.mxu0 %v653
    %693 = vmatprep.subr.mxu0 0.0
    %694 = vmatpush1.xpose.msra.mxu0 %v656
    %695 = vmatprep.subr.mxu0 0.0
    %696 = vmatpush1.xpose.msra.mxu0 %v659
    %697 = vmatprep.subr.mxu0 0.0
    %698 = vmatpush1.xpose.msra.mxu0 %v662
    %699 = vmatprep.subr.mxu0 0.0
    %700 = vmatpush1.xpose.msra.mxu0 %v665
    %701 = vmatprep.subr.mxu0 0.0
    %702 = vmatpush1.xpose.msra.mxu0 %v668
    %703 = vmatprep.subr.mxu0 0.0
    %704 = vmatpush1.xpose.msra.mxu0 %v671
    %705 = vmatprep.subr.mxu0 0.0
    %706 = vmatpush1.xpose.msra.mxu0 0.0
    %707 = vmatprep.subr.mxu0 0.0
    %708 = vmatpush1.xpose.msra.mxu0 0.0
    %709 = vmatprep.subr.mxu0 0.0
    %710 = vmatpush1.xpose.msra.mxu0 0.0
    %711 = vmatprep.subr.mxu0 0.0
    %712 = vmatpush1.xpose.msra.mxu0 0.0
    %713 = vmatprep.subr.mxu0 0.0
    %714 = vmatpush1.xpose.msra.mxu0 0.0
    %715 = vmatprep.subr.mxu0 0.0
    %716 = vmatpush1.xpose.msra.mxu0 0.0
    %717 = vmatprep.subr.mxu0 0.0
    %718 = vmatpush1.xpose.msra.mxu0 0.0
    %719 = vmatprep.subr.mxu0 0.0
    %720 = vmatpush1.xpose.msra.mxu0 0.0
    %721 = vmatprep.subr.mxu0 0.0
    %722 = vmatpush1.xpose.msra.mxu0 0.0
    %723 = vmatprep.subr.mxu0 0.0
    %724 = vmatpush1.xpose.msra.mxu0 0.0
    %725 = vmatprep.subr.mxu0 0.0
    %726 = vmatpush1.xpose.msra.mxu0 0.0
    %727 = vmatprep.subr.mxu0 0.0
    %728 = vmatpush1.xpose.msra.mxu0 0.0
    %729 = vmatprep.subr.mxu0 0.0
    %730 = vmatpush1.xpose.msra.mxu0 0.0
    %731 = vmatprep.subr.mxu0 0.0
    %732 = vmatpush1.xpose.msra.mxu0 0.0
    %733 = vmatprep.subr.mxu0 0.0
    %734 = vmatpush1.xpose.msra.mxu0 0.0
    %735 = vmatprep.subr.mxu0 0.0
    %736 = vmatpush1.xpose.msra.mxu0 0.0
    %737 = vmatprep.mubr.f32.mxu0 0.0
    %738 = vmatmul.mubr.f32.gmra.mrb[0].mxu0 %v623
    %v739 = vpop.f32.mrb[0].mxu0
    %v740 = vadd.f32 %v621, %v739
    %v741 = vpop.f32.mrb[0].mxu0
    %742 = vdwg.mxu0
    %743 = vst [vmem:[#allocation4] sm:$0x1] %v740
    // Predicated region
    $region34: #{fully_connected_mlp_forward.1} parent=1 // pred_check
      _
    $region35: #{fully_connected_mlp_forward.1} parent=1 // pred_check_branch
      %745 = sbr.rel (0) target = $region37
    $region36: #{fully_connected_mlp_forward.1} parent=1 // pred_region
      %s747 = ssub.s32 16, 16
      %748 = vsyncadd [#allocation5], %s747
      %s750 = sshll.u32 [#allocation4], 4
      %s751 = int_to_ptr.vmem [resolvable:$true] %s750
      %753 = dma.vmem_to_hbm [thread:$0]  %s751, 16, %s8, [#allocation5]
    $region37: #{fully_connected_mlp_forward.1} parent=1 // pred_fallthru
      _
    // Predicated region
    $region38: #{fully_connected_mlp_forward.1} parent=1 // pred_check
      _
    $region39: #{fully_connected_mlp_forward.1} parent=1 // pred_check_branch
      %755 = sbr.rel (0) target = $region41
    $region40: #{fully_connected_mlp_forward.1} parent=1 // pred_region
      %756 = dma.done [#allocation5], 16
    $region41: #{fully_connected_mlp_forward.1} parent=1 // pred_fallthru
      _
    %757 = vsyncpa [#allocation5], 1

</llo_original>
